<compile_context>
chip_gen: v6e
topology: v6e:2x2x1
jax: 0.10.0
libtpu: 0.0.40
codegen_flags: <defaults>
</compile_context>

<pallas_src>
import math

import jax
import jax.numpy as jnp
from jax.experimental import pallas as pl
from jax.experimental.pallas import tpu as pltpu


# ----------------------------------------------------------------------------
# Kernel 1: time-embedding MLP
#   emb_t    = timestep_embedding(time_t, H)   (computed in-kernel, odd-H safe)
#   hidden_t = Linear(H, 2H) -> SiLU -> Linear(2H, H)
# Weights/biases are bf16; dots run bf16 x bf16 -> f32 accumulate on the MXU.
# ----------------------------------------------------------------------------
def _time_mlp_kernel(t_ref, w1_ref, b1_ref, w2_ref, b2_ref, out_ref):
    B, H = out_ref.shape
    half = max(H // 2, 1)                                    # guard H < 2

    # timestep_embedding: cat([cos(t*f), sin(t*f)], -1), zero-pad last lane if H odd
    t = t_ref[...]                                           # [B, 1] f32
    lane = jax.lax.broadcasted_iota(jnp.int32, (B, H), 1)    # [B, H]
    j = jnp.where(lane < half, lane, lane - half).astype(jnp.float32)
    freqs = jnp.exp((-math.log(10000.0) / half) * j)         # EUP exp, ~free
    args = t * freqs
    emb = jnp.where(lane < half, jnp.cos(args), jnp.sin(args))
    emb = jnp.where(lane < 2 * half, emb, 0.0)               # odd-H zero pad

    # Keep weights bf16 in VMEM; cast the small activations instead (accepted
    # numerics trade vs. the f32 PyTorch reference, accumulation stays f32).
    h = jnp.dot(emb.astype(w1_ref.dtype), w1_ref[...],
                preferred_element_type=jnp.float32)
    h = h + b1_ref[...].astype(jnp.float32)
    h = h * jax.nn.sigmoid(h)                                # SiLU
    out = jnp.dot(h.astype(w2_ref.dtype), w2_ref[...],
                  preferred_element_type=jnp.float32)
    out_ref[...] = out + b2_ref[...].astype(jnp.float32)


# ----------------------------------------------------------------------------
# Kernel 2: hidden_state = x_t + position_embeddings  (mem-bound elementwise add)
# Works for both the flattened (B, flat_tile)+(1, flat_tile) layout and the
# 3-D fallback (B, s_tile, H)+(1, s_tile, H); pos broadcasts over the batch dim.
# Add happens in the native hidden dtype (single rounding, no f32 round-trip).
# ----------------------------------------------------------------------------
def _add_pos_kernel(x_ref, pos_ref, out_ref):
    out_ref[...] = (x_ref[...] + pos_ref[...]).astype(out_ref.dtype)


def _full_spec(shape):
    # Whole-array block for the tiny grid-less time-MLP call.
    return pl.BlockSpec(shape, lambda: (0,) * len(shape))


_VMEM_BUDGET = 24 << 20        # pipelined footprint target (fits 32 MiB scoped VMEM)
_VMEM_LIMIT = 32 << 20         # explicit scoped-VMEM limit (safe on v5e/v6e/v7x)


def _pick_flat_tile(F, B, itemsize, budget_bytes=_VMEM_BUDGET):
    """Flat-axis tile (multiple of 8*128=1024 lanes*sublanes) sized so that
    x(dbl) + out(dbl) + pos(dbl) stay under budget."""
    per_elem = (4 * B + 2) * itemsize
    tile = budget_bytes // max(1, per_elem)
    tile = (tile // 1024) * 1024
    tile = max(1024, tile)
    return F if tile >= F else int(tile)


def _pick_seq_tile(S, B, H, itemsize, budget_bytes=_VMEM_BUDGET):
    """Fallback (lane-sparse) tiling when S*H is not a multiple of 128."""
    per_row = (4 * B + 2) * H * itemsize
    rows = budget_bytes // max(1, per_row)
    rows = (rows // 8) * 8
    rows = max(8, rows)
    return S if rows >= S else int(rows)


def planner_estimator_forward(params, x_t, time_t, attention_mask,
                              cross_encodings, cross_attention_mask):
    B, S, H = x_t.shape
    hidden_dtype = x_t.dtype
    itemsize = jnp.dtype(hidden_dtype).itemsize

    # ---- hidden_t = time_emb(timestep_embedding(time_t, H)) : tiny pallas_call ----
    time_2d = time_t.astype(jnp.float32).reshape(B, 1)
    mlp_ins = (time_2d, params["w1"], params["b1"], params["w2"], params["b2"])
    hidden_t = pl.pallas_call(
        _time_mlp_kernel,
        out_shape=jax.ShapeDtypeStruct((B, H), jnp.float32),
        in_specs=[_full_spec(a.shape) for a in mlp_ins],
        out_specs=_full_spec((B, H)),
    )(*mlp_ins)

    # ---- hidden_state = x_t + position_embeddings(arange(S)) ----
    pos = params["pos_table"][:S][None].astype(hidden_dtype)   # [1, S, H]
    cost = pl.CostEstimate(flops=B * S * H, transcendentals=0,
                           bytes_accessed=(2 * B * S * H + S * H) * itemsize)
    cparams = pltpu.CompilerParams(dimension_semantics=("parallel",),
                                   vmem_limit_bytes=_VMEM_LIMIT)
    F = S * H
    if F % 128 == 0:
        # Lane-dense path: flatten (S, H) -> S*H so every vst is full-width.
        flat_tile = _pick_flat_tile(F, B, itemsize)
        x_flat = x_t.reshape(B, F)
        pos_flat = pos.reshape(1, F)
        hidden_flat = pl.pallas_call(
            _add_pos_kernel,
            out_shape=jax.ShapeDtypeStruct((B, F), hidden_dtype),
            grid=(pl.cdiv(F, flat_tile),),
            in_specs=[
                pl.BlockSpec((B, flat_tile), lambda t: (0, t)),    # x tile (batch folded)
                pl.BlockSpec((1, flat_tile), lambda t: (0, t)),    # pos tile (broadcast over B)
            ],
            out_specs=pl.BlockSpec((B, flat_tile), lambda t: (0, t)),
            compiler_params=cparams,
            cost_estimate=cost,
        )(x_flat, pos_flat)
        hidden_state = hidden_flat.reshape(B, S, H)
    else:
        # Fallback: keep (B, s_tile, H) blocks (H stays whole; may be lane-sparse).
        s_tile = _pick_seq_tile(S, B, H, itemsize)
        hidden_state = pl.pallas_call(
            _add_pos_kernel,
            out_shape=jax.ShapeDtypeStruct((B, S, H), hidden_dtype),
            grid=(pl.cdiv(S, s_tile),),
            in_specs=[
                pl.BlockSpec((B, s_tile, H), lambda s: (0, s, 0)),
                pl.BlockSpec((1, s_tile, H), lambda s: (0, s, 0)),
            ],
            out_specs=pl.BlockSpec((B, s_tile, H), lambda s: (0, s, 0)),
            compiler_params=cparams,
            cost_estimate=cost,
        )(x_t, pos)

    # ---- extended attention masks: tiny, plain JAX (XLA fuses this for free) ----
    if jnp.issubdtype(hidden_dtype, jnp.floating):
        neg_min = float(jnp.finfo(hidden_dtype).min)
    else:
        neg_min = float(jnp.finfo(jnp.float32).min)
    ext_attention_mask = (1.0 - attention_mask[:, None, None, :]) * neg_min
    ext_cond_mask = (1.0 - cross_attention_mask[:, None, None, :]) * neg_min

    # TODO(synk): TransformerEncoder(config) is not defined in the provided source,
    # so `self.encoder(x=..., attention_mask=..., emb_t=..., cond=..., cond_mask=...)`
    # cannot be reproduced; its exact inputs are returned instead.
    return {
        "hidden_state": hidden_state,
        "hidden_t": hidden_t,
        "attention_mask": ext_attention_mask,
        "cond": cross_encodings,
        "cond_mask": ext_cond_mask,
    }


def init_params(key, hidden_size, max_position_embeddings, hidden_dtype=jnp.float32):
    H = hidden_size
    k1, k2, k3, k4, k5 = jax.random.split(key, 5)
    scale = 0.02
    return {
        # time_emb = Linear(H, 2H) -> SiLU -> Linear(2H, H); transposed vs. PyTorch,
        # stored bf16 and used bf16 inside the MXU (f32 accumulate).
        "w1": (scale * jax.random.normal(k1, (H, 2 * H), jnp.float32)).astype(jnp.bfloat16),
        "b1": (scale * jax.random.normal(k2, (1, 2 * H), jnp.float32)).astype(jnp.bfloat16),
        "w2": (scale * jax.random.normal(k3, (2 * H, H), jnp.float32)).astype(jnp.bfloat16),
        "b2": (scale * jax.random.normal(k4, (1, H), jnp.float32)).astype(jnp.bfloat16),
        # nn.Embedding(max_position_embeddings, H), stored in the hidden dtype so the
        # pos DMA/VMEM share matches x_t.
        "pos_table": (scale * jax.random.normal(
            k5, (max_position_embeddings, H), jnp.float32)).astype(hidden_dtype),
    }


def _reference_forward(params, x_t, time_t):
    """Pure-JAX reference for the Pallas-computed pieces (same bf16 params)."""
    B, S, H = x_t.shape
    half = max(H // 2, 1)
    freqs = jnp.exp(-math.log(10000.0) * jnp.arange(half, dtype=jnp.float32) / half)
    args = time_t.astype(jnp.float32)[:, None] * freqs[None]
    emb = jnp.concatenate([jnp.cos(args), jnp.sin(args)], axis=-1)
    if H % 2:
        emb = jnp.concatenate([emb, jnp.zeros_like(emb[:, :1])], axis=-1)
    h = emb @ params["w1"].astype(jnp.float32) + params["b1"].astype(jnp.float32)
    h = h * jax.nn.sigmoid(h)
    hidden_t = h @ params["w2"].astype(jnp.float32) + params["b2"].astype(jnp.float32)
    hidden_state = x_t + params["pos_table"][:S][None].astype(x_t.dtype)
    return hidden_t, hidden_state


if __name__ == "__main__":
    B, S, H = 2, 8, 32          # batch, seq, hidden_size
    MAX_POS = 16                # config.max_position_embeddings
    SC = 8                      # cross-encoding (condition) sequence length

    key = jax.random.PRNGKey(0)
    kp, kx, kt, kc, km = jax.random.split(key, 5)

    params = init_params(kp, H, MAX_POS, hidden_dtype=jnp.float32)
    x_t = jax.random.normal(kx, (B, S, H), jnp.float32)
    time_t = jax.random.uniform(kt, (B,), jnp.float32, 0.0, 1000.0)
    cross_encodings = jax.random.normal(kc, (B, SC, H), jnp.float32)
    attention_mask = jnp.ones((B, S), jnp.float32)
    cross_attention_mask = (jax.random.uniform(km, (B, SC)) > 0.3).astype(jnp.float32)

    out = jax.jit(planner_estimator_forward)(
        params, x_t, time_t, attention_mask, cross_encodings, cross_attention_mask)
    jax.block_until_ready(out)

    # Light numerical check against the pure-JAX reference (same params).
    ref_t, ref_hs = _reference_forward(params, x_t, time_t)
    assert jnp.allclose(out["hidden_t"], ref_t, atol=1e-2, rtol=1e-2)
    assert jnp.allclose(out["hidden_state"], ref_hs, atol=1e-5, rtol=1e-5)

    print("KERNEL_OK")
</pallas_src>

<mosaic_0001>
module attributes {stable_mosaic.version = 11 : i64} {
  func.func @_time_mlp_kernel(%arg0: memref<2x1xf32, #tpu.memory_space<vmem>>, %arg1: memref<32x64xbf16, #tpu.memory_space<vmem>>, %arg2: memref<1x64xbf16, #tpu.memory_space<vmem>>, %arg3: memref<64x32xbf16, #tpu.memory_space<vmem>>, %arg4: memref<1x32xbf16, #tpu.memory_space<vmem>>, %arg5: memref<2x32xf32, #tpu.memory_space<vmem>>) attributes {dimension_semantics = [], scalar_prefetch = 0 : i64, scratch_operands = 0 : i64, tpu.core_type = #tpu.core_type<tc>} {
    %c0 = arith.constant 0 : index
    %c0_0 = arith.constant 0 : index
    %0 = vector.load %arg0[%c0, %c0_0] : memref<2x1xf32, #tpu.memory_space<vmem>>, vector<2x1xf32>
    %1 = tpu.iota {dimensions = array<i32: 1>} : vector<2x32xi32>
    %c16_i32 = arith.constant 16 : i32
    %2 = vector.broadcast %c16_i32 : i32 to vector<2x32xi32>
    %3 = arith.cmpi slt, %1, %2 : vector<2x32xi32>
    %c16_i32_1 = arith.constant 16 : i32
    %4 = vector.broadcast %c16_i32_1 : i32 to vector<2x32xi32>
    %5 = arith.subi %1, %4 : vector<2x32xi32>
    %6 = arith.select %3, %1, %5 : vector<2x32xi1>, vector<2x32xi32>
    %7 = arith.sitofp %6 : vector<2x32xi32> to vector<2x32xf32>
    %cst = arith.constant -0.575646281 : f32
    %8 = vector.broadcast %cst : f32 to vector<2x32xf32>
    %9 = arith.mulf %8, %7 : vector<2x32xf32>
    %10 = math.exp %9 : vector<2x32xf32>
    %11 = vector.broadcast %0 : vector<2x1xf32> to vector<2x32xf32>
    %12 = arith.mulf %11, %10 : vector<2x32xf32>
    %c16_i32_2 = arith.constant 16 : i32
    %13 = vector.broadcast %c16_i32_2 : i32 to vector<2x32xi32>
    %14 = arith.cmpi slt, %1, %13 : vector<2x32xi32>
    %15 = math.cos %12 : vector<2x32xf32>
    %16 = math.sin %12 : vector<2x32xf32>
    %17 = arith.select %14, %15, %16 : vector<2x32xi1>, vector<2x32xf32>
    %c32_i32 = arith.constant 32 : i32
    %18 = vector.broadcast %c32_i32 : i32 to vector<2x32xi32>
    %19 = arith.cmpi slt, %1, %18 : vector<2x32xi32>
    %cst_3 = arith.constant 0.000000e+00 : f32
    %20 = vector.broadcast %cst_3 : f32 to vector<2x32xf32>
    %21 = arith.select %19, %17, %20 : vector<2x32xi1>, vector<2x32xf32>
    %22 = arith.truncf %21 : vector<2x32xf32> to vector<2x32xbf16>
    %c0_4 = arith.constant 0 : index
    %c0_5 = arith.constant 0 : index
    %23 = vector.load %arg1[%c0_4, %c0_5] : memref<32x64xbf16, #tpu.memory_space<vmem>>, vector<32x64xbf16>
    %cst_6 = arith.constant dense<0.000000e+00> : vector<2x64xf32>
    %24 = tpu.matmul %22, %23, %cst_6 {dimension_numbers = #tpu.dot_dimension_numbers<[1], [0], [0], [1], [0, 0, 1, 1], [], []>} : vector<2x32xbf16>, vector<32x64xbf16>, vector<2x64xf32> -> vector<2x64xf32>
    %c0_7 = arith.constant 0 : index
    %c0_8 = arith.constant 0 : index
    %25 = vector.load %arg2[%c0_7, %c0_8] : memref<1x64xbf16, #tpu.memory_space<vmem>>, vector<1x64xbf16>
    %26 = arith.extf %25 : vector<1x64xbf16> to vector<1x64xf32>
    %27 = vector.broadcast %26 : vector<1x64xf32> to vector<2x64xf32>
    %28 = arith.addf %24, %27 : vector<2x64xf32>
    %29 = arith.negf %28 : vector<2x64xf32>
    %30 = math.exp %29 : vector<2x64xf32>
    %cst_9 = arith.constant 1.000000e+00 : f32
    %31 = vector.broadcast %cst_9 : f32 to vector<2x64xf32>
    %32 = arith.addf %31, %30 : vector<2x64xf32>
    %33 = arith.divf %31, %32 : vector<2x64xf32>
    %34 = arith.mulf %28, %33 : vector<2x64xf32>
    %35 = arith.truncf %34 : vector<2x64xf32> to vector<2x64xbf16>
    %c0_10 = arith.constant 0 : index
    %c0_11 = arith.constant 0 : index
    %36 = vector.load %arg3[%c0_10, %c0_11] : memref<64x32xbf16, #tpu.memory_space<vmem>>, vector<64x32xbf16>
    %cst_12 = arith.constant dense<0.000000e+00> : vector<2x32xf32>
    %37 = tpu.matmul %35, %36, %cst_12 {dimension_numbers = #tpu.dot_dimension_numbers<[1], [0], [0], [1], [0, 0, 1, 1], [], []>} : vector<2x64xbf16>, vector<64x32xbf16>, vector<2x32xf32> -> vector<2x32xf32>
    %c0_13 = arith.constant 0 : index
    %c0_14 = arith.constant 0 : index
    %38 = vector.load %arg4[%c0_13, %c0_14] : memref<1x32xbf16, #tpu.memory_space<vmem>>, vector<1x32xbf16>
    %39 = arith.extf %38 : vector<1x32xbf16> to vector<1x32xf32>
    %40 = vector.broadcast %39 : vector<1x32xf32> to vector<2x32xf32>
    %41 = arith.addf %37, %40 : vector<2x32xf32>
    %c0_15 = arith.constant 0 : index
    %c0_16 = arith.constant 0 : index
    %42 = vector.load %arg5[%c0_15, %c0_16] : memref<2x32xf32, #tpu.memory_space<vmem>>, vector<2x32xf32>
    tpu.vector_store %arg5[%c0_15, %c0_16], %41 {strides = array<i32>} : memref<2x32xf32, #tpu.memory_space<vmem>>, vector<2x32xf32>,
    return
  }
}

module attributes {stable_mosaic.version = 11 : i64} {
  func.func @_add_pos_kernel(%arg0: i32, %arg1: memref<2x256xf32, #tpu.memory_space<vmem>>, %arg2: memref<1x256xf32, #tpu.memory_space<vmem>>, %arg3: memref<2x256xf32, #tpu.memory_space<vmem>>) attributes {dimension_semantics = [#tpu.dimension_semantics<parallel>], iteration_bounds = array<i64: 1>, scalar_prefetch = 0 : i64, scratch_operands = 0 : i64, tpu.core_type = #tpu.core_type<tc>, window_params = [{transform_indices = @transform_0, window_bounds = array<i64: 2, 256>}, {transform_indices = @transform_1, window_bounds = array<i64: 1, 256>}, {transform_indices = @transform_2, window_bounds = array<i64: 2, 256>}]} {
    %c0 = arith.constant 0 : index
    %c0_0 = arith.constant 0 : index
    %0 = vector.load %arg1[%c0, %c0_0] : memref<2x256xf32, #tpu.memory_space<vmem>>, vector<2x256xf32>
    %c0_1 = arith.constant 0 : index
    %c0_2 = arith.constant 0 : index
    %1 = vector.load %arg2[%c0_1, %c0_2] : memref<1x256xf32, #tpu.memory_space<vmem>>, vector<1x256xf32>
    %2 = vector.broadcast %1 : vector<1x256xf32> to vector<2x256xf32>
    %3 = arith.addf %0, %2 : vector<2x256xf32>
    %c0_3 = arith.constant 0 : index
    %c0_4 = arith.constant 0 : index
    %4 = vector.load %arg3[%c0_3, %c0_4] : memref<2x256xf32, #tpu.memory_space<vmem>>, vector<2x256xf32>
    tpu.vector_store %arg3[%c0_3, %c0_4], %3 {strides = array<i32>} : memref<2x256xf32, #tpu.memory_space<vmem>>, vector<2x256xf32>,
    return
  }
  func.func @transform_0(%arg0: i32) -> (i32, i32) {
    %c0_i32 = arith.constant 0 : i32
    %c0_i32_0 = arith.constant 0 : i32
    return %c0_i32, %arg0 : i32, i32
  }
  func.func @transform_1(%arg0: i32) -> (i32, i32) {
    %c0_i32 = arith.constant 0 : i32
    %c0_i32_0 = arith.constant 0 : i32
    return %c0_i32, %arg0 : i32, i32
  }
  func.func @transform_2(%arg0: i32) -> (i32, i32) {
    %c0_i32 = arith.constant 0 : i32
    %c0_i32_0 = arith.constant 0 : i32
    return %c0_i32, %arg0 : i32, i32
  }
}

</mosaic_0001>

<llo_original>
// kernel: planner_estimator_forward.3
$region0: #{planner_estimator_forward.3}
  #allocation0 [shape = 'u32[]', space=smem, size = 0x4, offset = 0x4, fixed_abs, tag = 'smem constant byte address 0x4 - core index']
  #allocation1 [shape = 'u32[144,128]{1,0:T(1,128)}', space=vmem, size = 0x12000, scoped, tag = 'internal scratch']
  %s0 = inlined_call_operand.vmem [shape: f32[2,256], index: 0, kind: input, shape index: {}]
  %s1 = inlined_call_operand.vmem [shape: f32[1,256], index: 1, kind: input, shape index: {}]
  %s2 = inlined_call_operand.vmem [shape: f32[2,256], index: 2, kind: output, shape index: {}]
  %s3 = sld [smem:[#allocation0]]
  $region18: #{planner_estimator_forward.3} parent=0
    _
  %s5 = ssub.s32 1, %s3
  %s6 = scalar_select 0, %s5, %s3
  // Predicated region
  $region2: #{planner_estimator_forward.3} parent=0 // pred_check
    _
  $region3: #{planner_estimator_forward.3} parent=0 // pred_check_branch
    %8 = sbr.rel (0) target = $region5
  $region4: #{planner_estimator_forward.3} parent=0 // pred_region
    _
  $region5: #{planner_estimator_forward.3} parent=0 // pred_fallthru
    _
  // Predicated region
  $region6: #{planner_estimator_forward.3} parent=0 // pred_check
    _
  $region7: #{planner_estimator_forward.3} parent=0 // pred_check_branch
    %10 = sbr.rel (0) target = $region9
  $region8: #{planner_estimator_forward.3} parent=0 // pred_region
    _
  $region9: #{planner_estimator_forward.3} parent=0 // pred_fallthru
    _
  %v11 = vld [vmem:[%s0] sm:$0xf]
  %v12 = vld [vmem:[%s1] sm:$0x3]
  %v14 = vlaneseq
  %v15 = vshrl.u32 %v14, 7
  %v16 = vsub.s32 0, %v15
  %v17 = vrot.slane %v12, %v16
  %v18 = vlaneseq
  %v19 = vshrl.u32 %v18, 7
  %v20 = vsub.s32 1, %v19
  %v21 = vrot.slane %v12, %v20
  %v22 = vcombine.low %v17, %v21
  %v24 = vunpack.c.l.s4 1983009808
  %v25 = vunpack.c.0.s8 %v24
  %v26 = vlaneseq
  %v27 = vshrl.u32 %v26, 7
  %v28 = vsub.s32 %v25, %v27
  %v29 = vrot.slane %v22, %v28
  %v31 = vadd.f32 %v11, %v29
  %32 = vst [vmem:[%s2] sm:$0xf] %v31
  // Predicated region
  $region10: #{planner_estimator_forward.3} parent=0 // pred_check
    _
  $region11: #{planner_estimator_forward.3} parent=0 // pred_check_branch
    %34 = sbr.rel (0) target = $region13
  $region12: #{planner_estimator_forward.3} parent=0 // pred_region
    _
  $region13: #{planner_estimator_forward.3} parent=0 // pred_fallthru
    _
  // Predicated region
  $region14: #{planner_estimator_forward.3} parent=0 // pred_check
    _
  $region15: #{planner_estimator_forward.3} parent=0 // pred_check_branch
    %36 = sbr.rel (0) target = $region17
  $region16: #{planner_estimator_forward.3} parent=0 // pred_region
    _
  $region17: #{planner_estimator_forward.3} parent=0 // pred_fallthru
    _

// kernel: planner_estimator_forward.2
$region0: #{planner_estimator_forward.2}
  #allocation0 [shape = 'u32[]', space=smem, size = 0x4, offset = 0x4, fixed_abs, tag = 'smem constant byte address 0x4 - core index']
  #allocation1 [shape = 'u32[144,128]{1,0:T(1,128)}', space=vmem, size = 0x12000, scoped, tag = 'internal scratch']
  %s0 = inlined_call_operand.vmem [shape: f32[2,1], index: 0, kind: input, shape index: {}]
  %s1 = inlined_call_operand.vmem [shape: bf16[32,64], index: 1, kind: input, shape index: {}]
  %s2 = inlined_call_operand.vmem [shape: bf16[1,64], index: 2, kind: input, shape index: {}]
  %s3 = inlined_call_operand.vmem [shape: bf16[64,32], index: 3, kind: input, shape index: {}]
  %s4 = inlined_call_operand.vmem [shape: bf16[1,32], index: 4, kind: input, shape index: {}]
  %s5 = inlined_call_operand.hbm [shape: f32[2,32], index: 5, kind: output, shape index: {}]
  %s6 = sld [smem:[#allocation0]]
  $region30: #{planner_estimator_forward.2} parent=0
    _
  %s8 = ssub.s32 1, %s6
  %s9 = scalar_select 0, %s8, %s6
  $region1: #{planner_estimator_forward.2} parent=0
    #allocation2 [shape = 'u8[1024]{0}', space=vmem, size = 0x400, scoped, tag = 'output window, operand 0, single buffered']
    #allocation3 [shape = 's32[1]{0}', space=sflag, size = 0x4, scoped, tag = 'scoped memory for planner_estimator_forward.2']
    %10 = vsyncpa [#allocation3], 0
    // Predicated region
    $region2: #{planner_estimator_forward.2} parent=1 // pred_check
      _
    $region3: #{planner_estimator_forward.2} parent=1 // pred_check_branch
      %12 = sbr.rel (0) target = $region5
    $region4: #{planner_estimator_forward.2} parent=1 // pred_region
      _
    $region5: #{planner_estimator_forward.2} parent=1 // pred_fallthru
      _
    // Predicated region
    $region6: #{planner_estimator_forward.2} parent=1 // pred_check
      _
    $region7: #{planner_estimator_forward.2} parent=1 // pred_check_branch
      %14 = sbr.rel (0) target = $region9
    $region8: #{planner_estimator_forward.2} parent=1 // pred_region
      _
    $region9: #{planner_estimator_forward.2} parent=1 // pred_fallthru
      _
    // Predicated region
    $region10: #{planner_estimator_forward.2} parent=1 // pred_check
      _
    $region11: #{planner_estimator_forward.2} parent=1 // pred_check_branch
      %16 = sbr.rel (0) target = $region13
    $region12: #{planner_estimator_forward.2} parent=1 // pred_region
      _
    $region13: #{planner_estimator_forward.2} parent=1 // pred_fallthru
      _
    // Predicated region
    $region14: #{planner_estimator_forward.2} parent=1 // pred_check
      _
    $region15: #{planner_estimator_forward.2} parent=1 // pred_check_branch
      %18 = sbr.rel (0) target = $region17
    $region16: #{planner_estimator_forward.2} parent=1 // pred_region
      _
    $region17: #{planner_estimator_forward.2} parent=1 // pred_fallthru
      _
    // Predicated region
    $region18: #{planner_estimator_forward.2} parent=1 // pred_check
      _
    $region19: #{planner_estimator_forward.2} parent=1 // pred_check_branch
      %20 = sbr.rel (0) target = $region21
    $region20: #{planner_estimator_forward.2} parent=1 // pred_region
      _
    $region21: #{planner_estimator_forward.2} parent=1 // pred_fallthru
      _
    %v22 = vld [vmem:[%s0] sm:$0x3]
    %v23 = vlaneseq
    %v24 = vand.u32 %v23, 127
    %vm25 = vcmp.lt.s32.totalorder %v24, 16
    %v26 = vsub.s32 %v24, 16
    %v27 = vsel %vm25, %v24, %v26
    %v28 = vcvt.s32.f32 %v27
    %v29 = vmul.f32 %v28, -0.5756463
    %v30 = vmul.f32 %v29, 1.442695
    %v31 = vpow.pop %v30
    %33 = vset.pattern.permute.xlu0 0
    %34 = vperm.xlu0 %33, %v22
    %v35 = vpop.permute.xlu0 %34
    %v37 = vmul.f32 %v35, %v31
    %v38 = vand.u32 2147483647, %v37
    %vm39 = vcmp.le.f32.partialorder %v38, 0.7853982
    %vm40 = vcmp.lt.s32.totalorder %v37, 0
    %v41 = vand.u32 %v37, 2139095040
    %v42 = vshrl.u32 %v41, 23
    %v43 = vsub.s32 %v42, 127
    %v44 = vand.u32 2147483647, %v37
    %v45 = vand.u32 %v44, 8388607
    %v46 = vor.u32 %v45, 8388608
    %v47 = vsub.s32 0, %v46
    %v48 = vadd.s32 %v43, 1
    %vm49 = vcmp.gt.s32.totalorder %v48, 0
    %v50 = vsel %vm49, %v48, 0
    %v51 = vshrl.u32 %v50, 5
    %v52 = vand.u32 %v50, 31
    %v53 = vsub.s32 32, %v52
    %v54 = vshrl.u32 683565275, %v53
    %v55 = vshll.u32 683565275, %v52
    %v56 = vshrl.u32 2475754826, %v53
    %v57 = vor.u32 %v55, %v56
    %v58 = vshll.u32 2475754826, %v52
    %v59 = vshrl.u32 2131351028, %v53
    %v60 = vor.u32 %v58, %v59
    %v61 = vshll.u32 2131351028, %v52
    %v62 = vshrl.u32 2102212464, %v53
    %v63 = vor.u32 %v61, %v62
    %v64 = vshll.u32 2102212464, %v52
    %v65 = vshrl.u32 920167782, %v53
    %v66 = vor.u32 %v64, %v65
    %v67 = vshll.u32 920167782, %v52
    %v68 = vshrl.u32 1326507024, %v53
    %v69 = vor.u32 %v67, %v68
    %vm70 = vcmp.lt.s32.totalorder %v51, 1
    %vm71 = vcmp.lt.s32.totalorder %v51, 2
    %vm72 = vcmp.lt.s32.totalorder %v51, 3
    %vm73 = vcmp.lt.s32.totalorder %v51, 4
    %v74 = vsel %vm70, %v54, %v57
    %v75 = vsel %vm73, %v63, 2102212464
    %v76 = vsel %vm72, %v60, %v75
    %v77 = vsel %vm71, %v74, %v76
    %v78 = vsel %vm70, %v57, %v60
    %v79 = vsel %vm73, %v66, 920167782
    %v80 = vsel %vm72, %v63, %v79
    %v81 = vsel %vm71, %v78, %v80
    %v82 = vsel %vm70, %v60, %v63
    %v83 = vsel %vm73, %v69, 1326507024
    %v84 = vsel %vm72, %v66, %v83
    %v85 = vsel %vm71, %v82, %v84
    %v86 = vshll.u32 %v46, 8
    %v87 = vmul.u32.u64.compose %v86, %v85
    %v88 = vextract.low.u32 %v87
    %v89 = vextract.high.u32 %v87
    %v90 = vmul.u32.u64.compose %v86, %v81
    %v91 = vextract.low.u32 %v90
    %v92 = vextract.high.u32 %v90
    %v93 = vmul.u32 %v86, %v77
    %v94 = vadd.s32 %v89, %v91
    %vm95 = vc.u32 %v89, %v91
    %v96 = vadd.s32 %v92, 1
    %v97 = vsel %vm95, %v96, %v92
    %v98 = vadd.s32 %v93, %v97
    %v99 = vadd.s32 %v98, 536870912
    %v100 = vshrl.u32 %v99, 30
    %v101 = vshll.u32 %v100, 30
    %v102 = vsub.s32 %v98, %v101
    %vm103 = vcmp.lt.s32.totalorder %v102, 0
    %v104 = vsub.s32 0, %v102
    %v105 = vsel %vm103, %v104, %v102
    %v106 = vclz %v105
    %v107 = vsub.s32 %v106, 2
    %vm108 = vcmp.gt.s32.totalorder 0, %v107
    %v109 = vsel %vm108, 0, %v107
    %v110 = vsub.s32 32, %v109
    %v111 = vshll.u32 %v102, %v109
    %v112 = vshrl.u32 %v94, %v110
    %v113 = vor.u32 %v111, %v112
    %v114 = vsub.s32 4294967266, %v109
    %v115 = vadd.s32 %v114, 127
    %v116 = vshll.u32 %v115, 23
    %v117 = vor.u32 4788187, %v116
    %v118 = vand.u32 2147483647, %v117
    %v120 = vcvt.s32.f32 %v113
    %v121 = vmul.f32 %v120, %v118
    %v122 = vxor.u32 %v121, 2147483648
    %v123 = vsel %vm40, %v122, %v121
    %v124 = vsub.s32 4, %v100
    %v125 = vsel %vm40, %v124, %v100
    %v126 = vsel %vm39, %v37, %v123
    %v127 = vsel %vm39, 0, %v125
    %v128 = vcosq.f32.pop %v126
    %v129 = vsinq.f32.pop %v126
    %vm130 = vweird.f32 %v37
    %v131 = vand.u32 %v127, 3
    %vm132 = vcmp.lt.s32.totalorder %v131, 2
    %vm133 = vcmp.eq.s32.totalorder %v131, 0
    %v134 = vxor.u32 %v129, 2147483648
    %v135 = vsel %vm133, %v128, %v134
    %vm136 = vcmp.eq.s32.totalorder %v131, 2
    %v137 = vxor.u32 %v128, 2147483648
    %v138 = vsel %vm136, %v137, %v129
    %v139 = vsel %vm132, %v135, %v138
    %v140 = vsel %vm130, nan, %v139
    %v141 = vand.u32 2147483647, %v37
    %vm142 = vcmp.le.f32.partialorder %v141, 0.7853982
    %vm143 = vcmp.lt.s32.totalorder %v37, 0
    %v144 = vand.u32 %v37, 2139095040
    %v145 = vshrl.u32 %v144, 23
    %v146 = vsub.s32 %v145, 127
    %v147 = vand.u32 2147483647, %v37
    %v148 = vand.u32 %v147, 8388607
    %v149 = vor.u32 %v148, 8388608
    %v150 = vsub.s32 0, %v149
    %v151 = vadd.s32 %v146, 1
    %vm152 = vcmp.gt.s32.totalorder %v151, 0
    %v153 = vsel %vm152, %v151, 0
    %v154 = vshrl.u32 %v153, 5
    %v155 = vand.u32 %v153, 31
    %v156 = vsub.s32 32, %v155
    %v157 = vshrl.u32 683565275, %v156
    %v158 = vshll.u32 683565275, %v155
    %v159 = vshrl.u32 2475754826, %v156
    %v160 = vor.u32 %v158, %v159
    %v161 = vshll.u32 2475754826, %v155
    %v162 = vshrl.u32 2131351028, %v156
    %v163 = vor.u32 %v161, %v162
    %v164 = vshll.u32 2131351028, %v155
    %v165 = vshrl.u32 2102212464, %v156
    %v166 = vor.u32 %v164, %v165
    %v167 = vshll.u32 2102212464, %v155
    %v168 = vshrl.u32 920167782, %v156
    %v169 = vor.u32 %v167, %v168
    %v170 = vshll.u32 920167782, %v155
    %v171 = vshrl.u32 1326507024, %v156
    %v172 = vor.u32 %v170, %v171
    %vm173 = vcmp.lt.s32.totalorder %v154, 1
    %vm174 = vcmp.lt.s32.totalorder %v154, 2
    %vm175 = vcmp.lt.s32.totalorder %v154, 3
    %vm176 = vcmp.lt.s32.totalorder %v154, 4
    %v177 = vsel %vm173, %v157, %v160
    %v178 = vsel %vm176, %v166, 2102212464
    %v179 = vsel %vm175, %v163, %v178
    %v180 = vsel %vm174, %v177, %v179
    %v181 = vsel %vm173, %v160, %v163
    %v182 = vsel %vm176, %v169, 920167782
    %v183 = vsel %vm175, %v166, %v182
    %v184 = vsel %vm174, %v181, %v183
    %v185 = vsel %vm173, %v163, %v166
    %v186 = vsel %vm176, %v172, 1326507024
    %v187 = vsel %vm175, %v169, %v186
    %v188 = vsel %vm174, %v185, %v187
    %v189 = vshll.u32 %v149, 8
    %v190 = vmul.u32.u64.compose %v189, %v188
    %v191 = vextract.low.u32 %v190
    %v192 = vextract.high.u32 %v190
    %v193 = vmul.u32.u64.compose %v189, %v184
    %v194 = vextract.low.u32 %v193
    %v195 = vextract.high.u32 %v193
    %v196 = vmul.u32 %v189, %v180
    %v197 = vadd.s32 %v192, %v194
    %vm198 = vc.u32 %v192, %v194
    %v199 = vadd.s32 %v195, 1
    %v200 = vsel %vm198, %v199, %v195
    %v201 = vadd.s32 %v196, %v200
    %v202 = vadd.s32 %v201, 536870912
    %v203 = vshrl.u32 %v202, 30
    %v204 = vshll.u32 %v203, 30
    %v205 = vsub.s32 %v201, %v204
    %vm206 = vcmp.lt.s32.totalorder %v205, 0
    %v207 = vsub.s32 0, %v205
    %v208 = vsel %vm206, %v207, %v205
    %v209 = vclz %v208
    %v210 = vsub.s32 %v209, 2
    %vm211 = vcmp.gt.s32.totalorder 0, %v210
    %v212 = vsel %vm211, 0, %v210
    %v213 = vsub.s32 32, %v212
    %v214 = vshll.u32 %v205, %v212
    %v215 = vshrl.u32 %v197, %v213
    %v216 = vor.u32 %v214, %v215
    %v217 = vsub.s32 4294967266, %v212
    %v218 = vadd.s32 %v217, 127
    %v219 = vshll.u32 %v218, 23
    %v220 = vor.u32 4788187, %v219
    %v221 = vand.u32 2147483647, %v220
    %v223 = vcvt.s32.f32 %v216
    %v224 = vmul.f32 %v223, %v221
    %v225 = vxor.u32 %v224, 2147483648
    %v226 = vsel %vm143, %v225, %v224
    %v227 = vsub.s32 4, %v203
    %v228 = vsel %vm143, %v227, %v203
    %v229 = vsel %vm142, %v37, %v226
    %v230 = vsel %vm142, 0, %v228
    %v231 = vcosq.f32.pop %v229
    %v232 = vsinq.f32.pop %v229
    %vm233 = vweird.f32 %v37
    %v234 = vadd.s32 %v230, 3
    %v235 = vand.u32 %v234, 3
    %vm236 = vcmp.lt.s32.totalorder %v235, 2
    %vm237 = vcmp.eq.s32.totalorder %v235, 0
    %v238 = vxor.u32 %v232, 2147483648
    %v239 = vsel %vm237, %v231, %v238
    %vm240 = vcmp.eq.s32.totalorder %v235, 2
    %v241 = vxor.u32 %v231, 2147483648
    %v242 = vsel %vm240, %v241, %v232
    %v243 = vsel %vm236, %v239, %v242
    %v244 = vsel %vm233, nan, %v243
    %v245 = vsel %vm25, %v140, %v244
    %vm246 = vcmp.lt.s32.totalorder %v24, 32
    %v247 = vsel %vm246, %v245, 0.0
    %v248 = vpack.c.bf16 %v247, %v247
    %v249 = vld [vmem:[%s1] sm:$0xf]
    %v250 = vld [vmem:[%s1 + $0x4] sm:$0xf]
    %v251 = vld [vmem:[%s1 + $0x8] sm:$0xf]
    %v252 = vld [vmem:[%s1 + $0xc] sm:$0xf]
    %v253 = vld [vmem:[%s2] sm:$0x1]
    %v254 = vunpack.c.l.bf16 %v253
    %v255 = vlaneseq
    %v256 = vshrl.u32 %v255, 7
    %v257 = vsub.s32 0, %v256
    %v258 = vrot.slane %v254, %v257
    %v263 = vunpack.c.l.b16 %v249
    %v264 = vunpack.c.l.b16 %v250
    %v265 = vunpack.c.l.b16 %v251
    %v266 = vunpack.c.l.b16 %v252
    %v267 = vpack.c.b16 %v264, %v263
    %v268 = vpack.c.b16 %v266, %v265
    %vm271 = vcmask 261120
    %v273 = vsel %vm271, %v248, 0
    %275 = vmatprep.subr.bf16.mxu0 0
    %276 = vmatpush1.bf16.msra.mxu0 0
    %277 = vmatprep.subr.bf16.mxu0 0
    %278 = vmatpush1.bf16.msra.mxu0 0
    %279 = vmatprep.subr.bf16.mxu0 0
    %280 = vmatpush1.bf16.msra.mxu0 0
    %281 = vmatprep.subr.bf16.mxu0 0
    %282 = vmatpush1.bf16.msra.mxu0 0
    %283 = vmatprep.subr.bf16.mxu0 0
    %284 = vmatpush1.bf16.msra.mxu0 0
    %285 = vmatprep.subr.bf16.mxu0 0
    %286 = vmatpush1.bf16.msra.mxu0 0
    %287 = vmatprep.subr.bf16.mxu0 0
    %288 = vmatpush1.bf16.msra.mxu0 %v268
    %289 = vmatprep.subr.bf16.mxu0 0
    %290 = vmatpush1.bf16.msra.mxu0 %v267
    %291 = vmatprep.subr.bf16.mxu0 0
    %292 = vmatpush2.bf16.msra.mxu0 0
    %293 = vmatprep.subr.bf16.mxu0 0
    %294 = vmatpush2.bf16.msra.mxu0 0
    %295 = vmatprep.subr.bf16.mxu0 0
    %296 = vmatpush2.bf16.msra.mxu0 0
    %297 = vmatprep.subr.bf16.mxu0 0
    %298 = vmatpush2.bf16.msra.mxu0 0
    %299 = vmatprep.subr.bf16.mxu0 0
    %300 = vmatpush2.bf16.msra.mxu0 0
    %301 = vmatprep.subr.bf16.mxu0 0
    %302 = vmatpush2.bf16.msra.mxu0 0
    %303 = vmatprep.subr.bf16.mxu0 0
    %304 = vmatpush2.bf16.msra.mxu0 0
    %305 = vmatprep.subr.bf16.mxu0 0
    %306 = vmatpush2.bf16.msra.mxu0 0
    %307 = vmatprep.mubr.bf16.mxu0 0
    %308 = vmatmul.mubr.bf16.gmra.mxu0 %v273
    %v309 = vpop.f32.mrf.mxu0
    %v310 = vadd.f32 %v258, %v309
    %v311 = vpop.f32.mrf.mxu0
    %v312 = vpop.f32.mrf.mxu0
    %v313 = vpop.f32.mrf.mxu0
    %314 = vdwg.mxu0
    %v315 = vxor.u32 %v310, 2147483648
    %v316 = vmul.f32 %v315, 1.442695
    %v317 = vpow.pop %v316
    %v318 = vadd.f32 %v317, 1.0
    %v319 = vrcp.pop %v318
    %v320 = vmul.f32 1.0, %v319
    %v321 = vmul.f32 %v310, %v320
    %v322 = vpack.c.bf16 %v321, %v321
    %v323 = vld [vmem:[%s3] sm:$0xf]
    %v324 = vld [vmem:[%s3 + $0x4] sm:$0xf]
    %v325 = vld [vmem:[%s3 + $0x8] sm:$0xf]
    %v326 = vld [vmem:[%s3 + $0xc] sm:$0xf]
    %v327 = vld [vmem:[%s3 + $0x10] sm:$0xf]
    %v328 = vld [vmem:[%s3 + $0x14] sm:$0xf]
    %v329 = vld [vmem:[%s3 + $0x18] sm:$0xf]
    %v330 = vld [vmem:[%s3 + $0x1c] sm:$0xf]
    %v331 = vld [vmem:[%s4] sm:$0x1]
    %v332 = vunpack.c.l.bf16 %v331
    %v333 = vlaneseq
    %v334 = vshrl.u32 %v333, 7
    %v335 = vsub.s32 0, %v334
    %v336 = vrot.slane %v332, %v335
    %v345 = vunpack.c.l.b16 %v323
    %v346 = vunpack.c.l.b16 %v324
    %v347 = vunpack.c.l.b16 %v325
    %v348 = vunpack.c.l.b16 %v326
    %v349 = vunpack.c.l.b16 %v327
    %v350 = vunpack.c.l.b16 %v328
    %v351 = vunpack.c.l.b16 %v329
    %v352 = vunpack.c.l.b16 %v330
    %v353 = vpack.c.b16 %v346, %v345
    %v354 = vpack.c.b16 %v348, %v347
    %v355 = vpack.c.b16 %v350, %v349
    %v356 = vpack.c.b16 %v352, %v351
    %vm361 = vcmask 523264
    %v363 = vsel %vm361, %v322, 0
    %365 = vmatprep.subr.bf16.mxu0 0
    %366 = vmatpush1.bf16.msra.mxu0 0
    %367 = vmatprep.subr.bf16.mxu0 0
    %368 = vmatpush1.bf16.msra.mxu0 0
    %369 = vmatprep.subr.bf16.mxu0 0
    %370 = vmatpush1.bf16.msra.mxu0 0
    %371 = vmatprep.subr.bf16.mxu0 0
    %372 = vmatpush1.bf16.msra.mxu0 0
    %373 = vmatprep.subr.bf16.mxu0 0
    %374 = vmatpush1.bf16.msra.mxu0 %v356
    %375 = vmatprep.subr.bf16.mxu0 0
    %376 = vmatpush1.bf16.msra.mxu0 %v355
    %377 = vmatprep.subr.bf16.mxu0 0
    %378 = vmatpush1.bf16.msra.mxu0 %v354
    %379 = vmatprep.subr.bf16.mxu0 0
    %380 = vmatpush1.bf16.msra.mxu0 %v353
    %381 = vmatprep.subr.bf16.mxu0 0
    %382 = vmatpush2.bf16.msra.mxu0 0
    %383 = vmatprep.subr.bf16.mxu0 0
    %384 = vmatpush2.bf16.msra.mxu0 0
    %385 = vmatprep.subr.bf16.mxu0 0
    %386 = vmatpush2.bf16.msra.mxu0 0
    %387 = vmatprep.subr.bf16.mxu0 0
    %388 = vmatpush2.bf16.msra.mxu0 0
    %389 = vmatprep.subr.bf16.mxu0 0
    %390 = vmatpush2.bf16.msra.mxu0 0
    %391 = vmatprep.subr.bf16.mxu0 0
    %392 = vmatpush2.bf16.msra.mxu0 0
    %393 = vmatprep.subr.bf16.mxu0 0
    %394 = vmatpush2.bf16.msra.mxu0 0
    %395 = vmatprep.subr.bf16.mxu0 0
    %396 = vmatpush2.bf16.msra.mxu0 0
    %397 = vmatprep.mubr.bf16.mxu0 0
    %398 = vmatmul.mubr.bf16.gmra.mxu0 %v363
    %v399 = vpop.f32.mrf.mxu0
    %v400 = vadd.f32 %v336, %v399
    %v401 = vpop.f32.mrf.mxu0
    %v402 = vpop.f32.mrf.mxu0
    %v403 = vpop.f32.mrf.mxu0
    %404 = vdwg.mxu0
    %vm405 = vcmask 254976
    %406 = vst.msk [vmem:[#allocation2] sm:$0x3] %vm405, %v400
    // Predicated region
    $region22: #{planner_estimator_forward.2} parent=1 // pred_check
      _
    $region23: #{planner_estimator_forward.2} parent=1 // pred_check_branch
      %408 = sbr.rel (0) target = $region25
    $region24: #{planner_estimator_forward.2} parent=1 // pred_region
      %s410 = ssub.s32 32, 32
      %411 = vsyncadd [#allocation3], %s410
      %s413 = sshll.u32 [#allocation2], 4
      %s414 = int_to_ptr.vmem [resolvable:$true] %s413
      %416 = dma.vmem_to_hbm [thread:$0]  %s414, 32, %s5, [#allocation3]
    $region25: #{planner_estimator_forward.2} parent=1 // pred_fallthru
      _
    // Predicated region
    $region26: #{planner_estimator_forward.2} parent=1 // pred_check
      _
    $region27: #{planner_estimator_forward.2} parent=1 // pred_check_branch
      %418 = sbr.rel (0) target = $region29
    $region28: #{planner_estimator_forward.2} parent=1 // pred_region
      %419 = dma.done [#allocation3], 32
    $region29: #{planner_estimator_forward.2} parent=1 // pred_fallthru
      _
    %420 = vsyncpa [#allocation3], 1

</llo_original>
